<compile_context>
chip_gen: v6e
topology: v6e:2x2x1
jax: 0.10.0
libtpu: 0.0.40
codegen_flags: <defaults>
</compile_context>

<pallas_src>
import functools

import jax
import jax.numpy as jnp
from jax.experimental import pallas as pl
from jax.experimental.pallas import tpu as pltpu


def _round_up(a: int, b: int) -> int:
    return ((a + b - 1) // b) * b


def _fused_head_kernel(x_ref, w_ref, b_cls_ref, b_bbox_ref, cls_ref, bbox_ref):
    # x_ref:    [TILE_N, C]         native dtype (f32/bf16), streamed over grid
    # w_ref:    [C, CLS_PAD+BBOX_PAD] bf16, VMEM-resident (same block every step)
    # b_*_ref:  [1, CLS_PAD] / [1, BBOX_PAD]  f32, VMEM-resident
    # cls_ref:  [TILE_N, CLS_PAD]   x.dtype, lane-dense (CLS_PAD % 128 == 0)
    # bbox_ref: [TILE_N, BBOX_PAD]  x.dtype, lane-dense
    x = x_ref[...].astype(w_ref.dtype)                     # in-kernel bf16 cast
    acc = jnp.dot(x, w_ref[...],
                  preferred_element_type=jnp.float32)      # MXU, f32 accumulate
    cls_pad = b_cls_ref.shape[-1]                          # static, lane-aligned
    cls_ref[...] = (acc[:, :cls_pad] + b_cls_ref[...]).astype(cls_ref.dtype)
    bbox_ref[...] = (acc[:, cls_pad:] + b_bbox_ref[...]).astype(bbox_ref.dtype)


def prepare_fused_params(w_cls, b_cls, w_bbox, b_bbox,
                         compute_dtype=jnp.bfloat16):
    """One-time prep: transpose, pad each head to 128 lanes, fuse along lanes.

    w_cls: [K, C], b_cls: [K], w_bbox: [4K, C], b_bbox: [4K] (PyTorch layout).
    Returns (w_fused [C, CLS_PAD+BBOX_PAD] bf16,
             b_cls_p [1, CLS_PAD] f32, b_bbox_p [1, BBOX_PAD] f32).
    """
    num_classes = w_cls.shape[0]
    num_bbox = w_bbox.shape[0]
    cls_pad = _round_up(num_classes, 128)
    bbox_pad = _round_up(num_bbox, 128)

    wc = jnp.pad(w_cls.T, ((0, 0), (0, cls_pad - num_classes)))     # [C, CLS_PAD]
    wb = jnp.pad(w_bbox.T, ((0, 0), (0, bbox_pad - num_bbox)))      # [C, BBOX_PAD]
    w_fused = jnp.concatenate([wc, wb], axis=1).astype(compute_dtype)

    b_cls_p = jnp.pad(b_cls.astype(jnp.float32),
                      (0, cls_pad - num_classes)).reshape(1, cls_pad)
    b_bbox_p = jnp.pad(b_bbox.astype(jnp.float32),
                       (0, bbox_pad - num_bbox)).reshape(1, bbox_pad)
    return w_fused, b_cls_p, b_bbox_p


@functools.partial(jax.jit, static_argnames=("num_classes", "tile_n"))
def fast_rcnn_predictor(x, w_fused, b_cls_p, b_bbox_p, *, num_classes,
                        tile_n=512):
    """x: [N, C]. Returns (scores [N, K], bbox_deltas [N, 4K]) in x.dtype."""
    n, c = x.shape
    cls_pad = b_cls_p.shape[-1]
    bbox_pad = b_bbox_p.shape[-1]
    out_pad = cls_pad + bbox_pad
    assert w_fused.shape == (c, out_pad)

    # Row tile: multiple of 16 (bf16 packs 2 rows/sublane), big enough that
    # typical N fits in 1-2 grid steps, small enough to keep ~<10 MB in VMEM
    # with double-buffering on all of v5e/v6e/v7x.
    eff_tile = min(tile_n, _round_up(max(n, 1), 16))
    num_steps = pl.cdiv(n, eff_tile)

    # Megacore sharding only pays off when there are enough row tiles to
    # amortize the duplicated resident-W fetch.
    dim_sem = ("parallel",) if num_steps >= 4 else ("arbitrary",)

    out_cls, out_bbox = pl.pallas_call(
        _fused_head_kernel,
        out_shape=(jax.ShapeDtypeStruct((n, cls_pad), x.dtype),
                   jax.ShapeDtypeStruct((n, bbox_pad), x.dtype)),
        grid_spec=pltpu.PrefetchScalarGridSpec(
            num_scalar_prefetch=0,
            grid=(num_steps,),
            in_specs=[
                pl.BlockSpec((eff_tile, c), lambda i: (i, 0)),    # stream rows
                pl.BlockSpec((c, out_pad), lambda i: (0, 0)),     # resident W
                pl.BlockSpec((1, cls_pad), lambda i: (0, 0)),     # resident b_cls
                pl.BlockSpec((1, bbox_pad), lambda i: (0, 0)),    # resident b_bbox
            ],
            out_specs=[
                pl.BlockSpec((eff_tile, cls_pad), lambda i: (i, 0)),
                pl.BlockSpec((eff_tile, bbox_pad), lambda i: (i, 0)),
            ],
        ),
        compiler_params=pltpu.CompilerParams(dimension_semantics=dim_sem),
    )(x, w_fused, b_cls_p, b_bbox_p)

    # Only the lane-padding (91->128, 364->384) is trimmed here; no dtype cast
    # and no row slicing remain in the wrapper.
    scores = out_cls[:, :num_classes]
    bbox_deltas = out_bbox[:, :num_classes * 4]
    return scores, bbox_deltas


def _init_linear(key, out_features, in_features, dtype=jnp.float32):
    # nn.Linear default init: U(-1/sqrt(in), 1/sqrt(in)).
    kw, kb = jax.random.split(key)
    bound = 1.0 / jnp.sqrt(jnp.asarray(in_features, dtype))
    w = jax.random.uniform(kw, (out_features, in_features), dtype,
                           minval=-bound, maxval=bound)
    b = jax.random.uniform(kb, (out_features,), dtype,
                           minval=-bound, maxval=bound)
    return w, b


def _reference(x, w_cls, b_cls, w_bbox, b_bbox):
    # Reference with the same bf16 operand quantization (f32 accumulation),
    # matching the kernel's numerics; semantics = nn.Linear(x) = x @ W.T + b.
    xb = x.astype(jnp.bfloat16).astype(jnp.float32)
    wc = w_cls.astype(jnp.bfloat16).astype(jnp.float32)
    wb = w_bbox.astype(jnp.bfloat16).astype(jnp.float32)
    return xb @ wc.T + b_cls, xb @ wb.T + b_bbox


def _run_case(key, n, in_channels, num_classes):
    kx, kcls, kbbox = jax.random.split(key, 3)
    x = jax.random.normal(kx, (n, in_channels), jnp.float32)
    w_cls, b_cls = _init_linear(kcls, num_classes, in_channels)
    w_bbox, b_bbox = _init_linear(kbbox, num_classes * 4, in_channels)

    # One-time fuse/transpose/pad of the parameters (outside the hot path).
    w_fused, b_cls_p, b_bbox_p = prepare_fused_params(w_cls, b_cls,
                                                      w_bbox, b_bbox)

    scores, bbox = fast_rcnn_predictor(x, w_fused, b_cls_p, b_bbox_p,
                                       num_classes=num_classes)
    jax.block_until_ready((scores, bbox))

    ref_scores, ref_bbox = _reference(x, w_cls, b_cls, w_bbox, b_bbox)
    assert scores.shape == (n, num_classes)
    assert bbox.shape == (n, num_classes * 4)
    assert scores.dtype == x.dtype and bbox.dtype == x.dtype
    assert jnp.allclose(scores, ref_scores, atol=2e-3, rtol=2e-3)
    assert jnp.allclose(bbox, ref_bbox, atol=2e-3, rtol=2e-3)


if __name__ == "__main__":
    key = jax.random.PRNGKey(0)
    k_small, k_large = jax.random.split(key)

    # Small demo shapes (consistent with the module's forward: x is [N, C]).
    _run_case(k_small, n=2, in_channels=32, num_classes=4)

    # Realistic Faster R-CNN head: 300 proposals, C=1024, K=91
    # (cls padded 91->128, bbox 364->384), exercising the partial-row-tile path.
    _run_case(k_large, n=300, in_channels=1024, num_classes=91)

    print("KERNEL_OK")
</pallas_src>

<mosaic_0001>
module attributes {stable_mosaic.version = 11 : i64} {
  func.func @_fused_head_kernel(%arg0: i32, %arg1: memref<16x32xf32, #tpu.memory_space<vmem>>, %arg2: memref<32x256xbf16, #tpu.memory_space<vmem>>, %arg3: memref<1x128xf32, #tpu.memory_space<vmem>>, %arg4: memref<1x128xf32, #tpu.memory_space<vmem>>, %arg5: memref<16x128xf32, #tpu.memory_space<vmem>>, %arg6: memref<16x128xf32, #tpu.memory_space<vmem>>) attributes {dimension_semantics = [#tpu.dimension_semantics<arbitrary>], iteration_bounds = array<i64: 1>, scalar_prefetch = 0 : i64, scratch_operands = 0 : i64, tpu.core_type = #tpu.core_type<tc>, window_params = [{transform_indices = @transform_0, window_bounds = array<i64: 16, 32>}, {pipeline_mode = #tpu.pipeline_mode<synchronous>, transform_indices = @transform_1, window_bounds = array<i64: 32, 256>}, {pipeline_mode = #tpu.pipeline_mode<synchronous>, transform_indices = @transform_2, window_bounds = array<i64: 1, 128>}, {pipeline_mode = #tpu.pipeline_mode<synchronous>, transform_indices = @transform_3, window_bounds = array<i64: 1, 128>}, {transform_indices = @transform_4, window_bounds = array<i64: 16, 128>}, {transform_indices = @transform_5, window_bounds = array<i64: 16, 128>}]} {
    %c0 = arith.constant 0 : index
    %c0_0 = arith.constant 0 : index
    %0 = vector.load %arg1[%c0, %c0_0] : memref<16x32xf32, #tpu.memory_space<vmem>>, vector<16x32xf32>
    %1 = arith.truncf %0 : vector<16x32xf32> to vector<16x32xbf16>
    %c0_1 = arith.constant 0 : index
    %c0_2 = arith.constant 0 : index
    %2 = vector.load %arg2[%c0_1, %c0_2] : memref<32x256xbf16, #tpu.memory_space<vmem>>, vector<32x256xbf16>
    %cst = arith.constant dense<0.000000e+00> : vector<16x256xf32>
    %3 = tpu.matmul %1, %2, %cst {dimension_numbers = #tpu.dot_dimension_numbers<[1], [0], [0], [1], [0, 0, 1, 1], [], []>} : vector<16x32xbf16>, vector<32x256xbf16>, vector<16x256xf32> -> vector<16x256xf32>
    %4 = vector.extract_strided_slice %3 {offsets = [0, 0], sizes = [16, 128], strides = [1, 1]} : vector<16x256xf32> to vector<16x128xf32>
    %c0_3 = arith.constant 0 : index
    %c0_4 = arith.constant 0 : index
    %5 = vector.load %arg3[%c0_3, %c0_4] : memref<1x128xf32, #tpu.memory_space<vmem>>, vector<1x128xf32>
    %6 = vector.broadcast %5 : vector<1x128xf32> to vector<16x128xf32>
    %7 = arith.addf %4, %6 : vector<16x128xf32>
    %c0_5 = arith.constant 0 : index
    %c0_6 = arith.constant 0 : index
    %8 = vector.load %arg5[%c0_5, %c0_6] : memref<16x128xf32, #tpu.memory_space<vmem>>, vector<16x128xf32>
    tpu.vector_store %arg5[%c0_5, %c0_6], %7 {strides = array<i32>} : memref<16x128xf32, #tpu.memory_space<vmem>>, vector<16x128xf32>,
    %9 = vector.extract_strided_slice %3 {offsets = [0, 128], sizes = [16, 128], strides = [1, 1]} : vector<16x256xf32> to vector<16x128xf32>
    %c0_7 = arith.constant 0 : index
    %c0_8 = arith.constant 0 : index
    %10 = vector.load %arg4[%c0_7, %c0_8] : memref<1x128xf32, #tpu.memory_space<vmem>>, vector<1x128xf32>
    %11 = vector.broadcast %10 : vector<1x128xf32> to vector<16x128xf32>
    %12 = arith.addf %9, %11 : vector<16x128xf32>
    %c0_9 = arith.constant 0 : index
    %c0_10 = arith.constant 0 : index
    %13 = vector.load %arg6[%c0_9, %c0_10] : memref<16x128xf32, #tpu.memory_space<vmem>>, vector<16x128xf32>
    tpu.vector_store %arg6[%c0_9, %c0_10], %12 {strides = array<i32>} : memref<16x128xf32, #tpu.memory_space<vmem>>, vector<16x128xf32>,
    return
  }
  func.func @transform_0(%arg0: i32) -> (i32, i32) {
    %c0_i32 = arith.constant 0 : i32
    %c0_i32_0 = arith.constant 0 : i32
    return %arg0, %c0_i32 : i32, i32
  }
  func.func @transform_1(%arg0: i32) -> (i32, i32) {
    %c0_i32 = arith.constant 0 : i32
    %c0_i32_0 = arith.constant 0 : i32
    %c0_i32_1 = arith.constant 0 : i32
    return %c0_i32, %c0_i32_0 : i32, i32
  }
  func.func @transform_2(%arg0: i32) -> (i32, i32) {
    %c0_i32 = arith.constant 0 : i32
    %c0_i32_0 = arith.constant 0 : i32
    %c0_i32_1 = arith.constant 0 : i32
    return %c0_i32, %c0_i32_0 : i32, i32
  }
  func.func @transform_3(%arg0: i32) -> (i32, i32) {
    %c0_i32 = arith.constant 0 : i32
    %c0_i32_0 = arith.constant 0 : i32
    %c0_i32_1 = arith.constant 0 : i32
    return %c0_i32, %c0_i32_0 : i32, i32
  }
  func.func @transform_4(%arg0: i32) -> (i32, i32) {
    %c0_i32 = arith.constant 0 : i32
    %c0_i32_0 = arith.constant 0 : i32
    return %arg0, %c0_i32 : i32, i32
  }
  func.func @transform_5(%arg0: i32) -> (i32, i32) {
    %c0_i32 = arith.constant 0 : i32
    %c0_i32_0 = arith.constant 0 : i32
    return %arg0, %c0_i32 : i32, i32
  }
}

</mosaic_0001>

<llo_original>
// kernel: fast_rcnn_predictor.1
$region0: #{fast_rcnn_predictor.1}
  #allocation0 [shape = 'u32[]', space=smem, size = 0x4, offset = 0x4, fixed_abs, tag = 'smem constant byte address 0x4 - core index']
  #allocation1 [shape = 'u32[144,128]{1,0:T(1,128)}', space=vmem, size = 0x12000, scoped, tag = 'internal scratch']
  %s0 = inlined_call_operand.hbm [shape: f32[2,32], index: 0, kind: input, shape index: {}]
  %s1 = inlined_call_operand.hbm [shape: bf16[32,256], index: 1, kind: input, shape index: {}]
  %s2 = inlined_call_operand.vmem [shape: f32[1,128], index: 2, kind: input, shape index: {}]
  %s3 = inlined_call_operand.vmem [shape: f32[1,128], index: 3, kind: input, shape index: {}]
  %s4 = inlined_call_operand.hbm [shape: f32[2,128], index: 4, kind: output, shape index: {0}]
  %s5 = inlined_call_operand.hbm [shape: f32[2,128], index: 5, kind: output, shape index: {1}]
  %6 = xla_tuple %s4, %s5
  %s7 = sld [smem:[#allocation0]]
  $region42: #{fast_rcnn_predictor.1} parent=0
    _
  %s9 = ssub.s32 1, %s7
  %s10 = scalar_select 0, %s9, %s7
  $region1: #{fast_rcnn_predictor.1} parent=0
    #allocation2 [shape = 'u8[8192]{0}', space=vmem, size = 0x2000, scoped, tag = 'input window, operand 0, single buffered']
    #allocation3 [shape = 's32[1]{0}', space=sflag, size = 0x4, scoped, tag = 'scoped memory for fast_rcnn_predictor.1']
    #allocation4 [shape = 's32[1]{0}', space=sflag, size = 0x4, scoped, tag = 'scoped memory for fast_rcnn_predictor.1']
    #allocation5 [shape = 'u8[16384]{0}', space=vmem, size = 0x4000, scoped, tag = 'input window, operand 1, single buffered']
    #allocation6 [shape = 's32[1]{0}', space=sflag, size = 0x4, scoped, tag = 'scoped memory for fast_rcnn_predictor.1']
    #allocation7 [shape = 'u8[8192]{0}', space=vmem, size = 0x2000, scoped, tag = 'output window, operand 0, single buffered']
    #allocation8 [shape = 'u8[8192]{0}', space=vmem, size = 0x2000, scoped, tag = 'output window, operand 1, single buffered']
    #allocation9 [shape = 's32[1]{0}', space=sflag, size = 0x4, scoped, tag = 'scoped memory for fast_rcnn_predictor.1']
    %11 = vsyncpa [#allocation3], 0
    %12 = vsyncpa [#allocation6], 0
    %13 = vsyncpa [#allocation4], 0
    %14 = vsyncpa [#allocation9], 0
    // Predicated region
    $region2: #{fast_rcnn_predictor.1} parent=1 // pred_check
      _
    $region3: #{fast_rcnn_predictor.1} parent=1 // pred_check_branch
      %16 = sbr.rel (0) target = $region5
    $region4: #{fast_rcnn_predictor.1} parent=1 // pred_region
      %s18 = ssub.s32 256, 32
      %19 = vsyncadd [#allocation3], %s18
      %s20 = sshll.u32 [#allocation2], 4
      %s21 = int_to_ptr.vmem [resolvable:$true] %s20
      %26 = dma.hbm_to_vmem [thread:$0]  %s0, 32, %s21, [#allocation3], 32, 32, 2
    $region5: #{fast_rcnn_predictor.1} parent=1 // pred_fallthru
      _
    // Predicated region
    $region6: #{fast_rcnn_predictor.1} parent=1 // pred_check
      _
    $region7: #{fast_rcnn_predictor.1} parent=1 // pred_check_branch
      %28 = sbr.rel (0) target = $region9
    $region8: #{fast_rcnn_predictor.1} parent=1 // pred_region
      %s30 = ssub.s32 512, 512
      %31 = vsyncadd [#allocation6], %s30
      %s32 = sshll.u32 [#allocation5], 4
      %s33 = int_to_ptr.vmem [resolvable:$true] %s32
      %38 = dma.hbm_to_vmem [thread:$0]  %s1, 512, %s33, [#allocation6], 128, 128, 8
    $region9: #{fast_rcnn_predictor.1} parent=1 // pred_fallthru
      _
    // Predicated region
    $region10: #{fast_rcnn_predictor.1} parent=1 // pred_check
      _
    $region11: #{fast_rcnn_predictor.1} parent=1 // pred_check_branch
      %40 = sbr.rel (0) target = $region13
    $region12: #{fast_rcnn_predictor.1} parent=1 // pred_region
      _
    $region13: #{fast_rcnn_predictor.1} parent=1 // pred_fallthru
      _
    // Predicated region
    $region14: #{fast_rcnn_predictor.1} parent=1 // pred_check
      _
    $region15: #{fast_rcnn_predictor.1} parent=1 // pred_check_branch
      %42 = sbr.rel (0) target = $region17
    $region16: #{fast_rcnn_predictor.1} parent=1 // pred_region
      _
    $region17: #{fast_rcnn_predictor.1} parent=1 // pred_fallthru
      _
    // Predicated region
    $region18: #{fast_rcnn_predictor.1} parent=1 // pred_check
      _
    $region19: #{fast_rcnn_predictor.1} parent=1 // pred_check_branch
      %44 = sbr.rel (0) target = $region21
    $region20: #{fast_rcnn_predictor.1} parent=1 // pred_region
      %45 = dma.done [#allocation3], 256
    $region21: #{fast_rcnn_predictor.1} parent=1 // pred_fallthru
      _
    // Predicated region
    $region22: #{fast_rcnn_predictor.1} parent=1 // pred_check
      _
    $region23: #{fast_rcnn_predictor.1} parent=1 // pred_check_branch
      %47 = sbr.rel (0) target = $region25
    $region24: #{fast_rcnn_predictor.1} parent=1 // pred_region
      %48 = dma.done [#allocation6], 512
    $region25: #{fast_rcnn_predictor.1} parent=1 // pred_fallthru
      _
    %v50 = vld [vmem:[#allocation2] sm:$0xff]
    %v51 = vld [vmem:[#allocation2 + $0x8] sm:$0xff]
    %v52 = vpack.c.bf16 %v51, %v50
    %v53 = vld [vmem:[#allocation5] sm:$0xff]
    %v54 = vld [vmem:[#allocation5 + $0x8] sm:$0xff]
    %v55 = vld [vmem:[#allocation5 + $0x10] sm:$0xff]
    %v56 = vld [vmem:[#allocation5 + $0x18] sm:$0xff]
    %v61 = vunpack.c.l.b16 %v53
    %v62 = vunpack.c.h.b16 %v53
    %v63 = vunpack.c.l.b16 %v54
    %v64 = vunpack.c.h.b16 %v54
    %v65 = vunpack.c.l.b16 %v55
    %v66 = vunpack.c.h.b16 %v55
    %v67 = vunpack.c.l.b16 %v56
    %v68 = vunpack.c.h.b16 %v56
    %v69 = vpack.c.b16 %v63, %v61
    %v70 = vpack.c.b16 %v64, %v62
    %v71 = vpack.c.b16 %v67, %v65
    %v72 = vpack.c.b16 %v68, %v66
    %vm77 = vcmask 261120
    %v79 = vsel %vm77, %v52, 0
    %81 = vmatprep.subr.bf16.mxu0 0
    %82 = vmatpush1.bf16.msra.mxu0 0
    %83 = vmatprep.subr.bf16.mxu0 0
    %84 = vmatpush1.bf16.msra.mxu0 0
    %85 = vmatprep.subr.bf16.mxu0 0
    %86 = vmatpush1.bf16.msra.mxu0 0
    %87 = vmatprep.subr.bf16.mxu0 0
    %88 = vmatpush1.bf16.msra.mxu0 0
    %89 = vmatprep.subr.bf16.mxu0 0
    %90 = vmatpush1.bf16.msra.mxu0 0
    %91 = vmatprep.subr.bf16.mxu0 0
    %92 = vmatpush1.bf16.msra.mxu0 0
    %93 = vmatprep.subr.bf16.mxu0 %v72
    %94 = vmatpush1.bf16.msra.mxu0 %v71
    %95 = vmatprep.subr.bf16.mxu0 %v70
    %96 = vmatpush1.bf16.msra.mxu0 %v69
    %97 = vmatprep.subr.bf16.mxu0 0
    %98 = vmatpush2.bf16.msra.mxu0 0
    %99 = vmatprep.subr.bf16.mxu0 0
    %100 = vmatpush2.bf16.msra.mxu0 0
    %101 = vmatprep.subr.bf16.mxu0 0
    %102 = vmatpush2.bf16.msra.mxu0 0
    %103 = vmatprep.subr.bf16.mxu0 0
    %104 = vmatpush2.bf16.msra.mxu0 0
    %105 = vmatprep.subr.bf16.mxu0 0
    %106 = vmatpush2.bf16.msra.mxu0 0
    %107 = vmatprep.subr.bf16.mxu0 0
    %108 = vmatpush2.bf16.msra.mxu0 0
    %109 = vmatprep.subr.bf16.mxu0 0
    %110 = vmatpush2.bf16.msra.mxu0 0
    %111 = vmatprep.subr.bf16.mxu0 0
    %112 = vmatpush2.bf16.msra.mxu0 0
    %113 = vmatprep.mubr.bf16.mxu0 0
    %114 = vmatmul.mubr.bf16.gmra.mxu0 %v79
    %v115 = vpop.f32.mrf.mxu0
    %v116 = vadd.f32 0.0, %v115
    %v117 = vpop.f32.mrf.mxu0
    %v118 = vadd.f32 0.0, %v117
    %v119 = vpop.f32.mrf.mxu0
    %v120 = vadd.f32 0.0, %v119
    %v121 = vpop.f32.mrf.mxu0
    %v122 = vadd.f32 0.0, %v121
    %123 = vdwg.mxu0
    %v124 = vld [vmem:[%s2] sm:$0x1]
    %v126 = vlaneseq
    %v127 = vshrl.u32 %v126, 7
    %v128 = vsub.s32 0, %v127
    %v129 = vrot.slane %v124, %v128
    %v131 = vadd.f32 %v116, %v129
    %v132 = vadd.f32 %v120, %v129
    %133 = vst [vmem:[#allocation7] sm:$0xff] %v131
    %134 = vst [vmem:[#allocation7 + $0x8] sm:$0xff] %v132
    %v135 = vld [vmem:[%s3] sm:$0x1]
    %v137 = vlaneseq
    %v138 = vshrl.u32 %v137, 7
    %v139 = vsub.s32 0, %v138
    %v140 = vrot.slane %v135, %v139
    %v142 = vadd.f32 %v118, %v140
    %v143 = vadd.f32 %v122, %v140
    %144 = vst [vmem:[#allocation8] sm:$0xff] %v142
    %145 = vst [vmem:[#allocation8 + $0x8] sm:$0xff] %v143
    // Predicated region
    $region26: #{fast_rcnn_predictor.1} parent=1 // pred_check
      _
    $region27: #{fast_rcnn_predictor.1} parent=1 // pred_check_branch
      %147 = sbr.rel (0) target = $region29
    $region28: #{fast_rcnn_predictor.1} parent=1 // pred_region
      %s149 = ssub.s32 256, 32
      %150 = vsyncadd [#allocation4], %s149
      %s151 = sshll.u32 [#allocation7], 4
      %s152 = int_to_ptr.vmem [resolvable:$true] %s151
      %157 = dma.vmem_to_hbm [thread:$0]  %s152, 32, %s4, [#allocation4], 32, 32, 2
    $region29: #{fast_rcnn_predictor.1} parent=1 // pred_fallthru
      _
    // Predicated region
    $region30: #{fast_rcnn_predictor.1} parent=1 // pred_check
      _
    $region31: #{fast_rcnn_predictor.1} parent=1 // pred_check_branch
      %159 = sbr.rel (0) target = $region33
    $region32: #{fast_rcnn_predictor.1} parent=1 // pred_region
      %s161 = ssub.s32 256, 32
      %162 = vsyncadd [#allocation9], %s161
      %s163 = sshll.u32 [#allocation8], 4
      %s164 = int_to_ptr.vmem [resolvable:$true] %s163
      %169 = dma.vmem_to_hbm [thread:$0]  %s164, 32, %s5, [#allocation9], 32, 32, 2
    $region33: #{fast_rcnn_predictor.1} parent=1 // pred_fallthru
      _
    // Predicated region
    $region34: #{fast_rcnn_predictor.1} parent=1 // pred_check
      _
    $region35: #{fast_rcnn_predictor.1} parent=1 // pred_check_branch
      %171 = sbr.rel (0) target = $region37
    $region36: #{fast_rcnn_predictor.1} parent=1 // pred_region
      %172 = dma.done [#allocation4], 256
    $region37: #{fast_rcnn_predictor.1} parent=1 // pred_fallthru
      _
    // Predicated region
    $region38: #{fast_rcnn_predictor.1} parent=1 // pred_check
      _
    $region39: #{fast_rcnn_predictor.1} parent=1 // pred_check_branch
      %174 = sbr.rel (0) target = $region41
    $region40: #{fast_rcnn_predictor.1} parent=1 // pred_region
      %175 = dma.done [#allocation9], 256
    $region41: #{fast_rcnn_predictor.1} parent=1 // pred_fallthru
      _
    %176 = vsyncpa [#allocation3], 1
    %177 = vsyncpa [#allocation6], 1
    %178 = vsyncpa [#allocation4], 1
    %179 = vsyncpa [#allocation9], 1

</llo_original>
